<compile_context>
chip_gen: v7x
topology: tpu7x:2x2x1
jax: 0.10.0
libtpu: 0.0.40
codegen_flags: <defaults>
</compile_context>

<pallas_src>
import functools
import math

import jax
import jax.numpy as jnp
from jax.experimental import pallas as pl
from jax.experimental.pallas import tpu as pltpu


def _round_up(x, m):
    return ((x + m - 1) // m) * m


def _vmem_capacity_bytes():
    try:
        return int(pltpu.get_tpu_info().vmem_capacity_bytes)
    except Exception:
        return 64 * 1024 * 1024  # conservative (v7x per-TC)


def _label_smoothing_kernel(x_ref, tgt_ref, *out_refs, n_rows, padding_idx,
                            confidence, smooth_val, conf_logconf,
                            smooth_logsmooth, return_true_dist):
    if return_true_dist:
        tdist_ref, loss_ref = out_refs
    else:
        (loss_ref,) = out_refs

    x = x_ref[...].astype(jnp.float32)          # (tile_n, V), upcast per tile
    tgt = tgt_ref[...]                          # (tile_n, 1) int32
    tn, v = x.shape

    col = jax.lax.broadcasted_iota(jnp.int32, (tn, v), 1)
    row = jax.lax.broadcasted_iota(jnp.int32, (tn, 1), 0) + pl.program_id(0) * tn
    is_tgt = col == tgt

    # merged zero-mask: padding_idx column, rows whose target is padding_idx,
    # and ragged rows past the true row count (garbage data in the last tile).
    zero_mask = (col == padding_idx) | (tgt == padding_idx) | (row >= n_rows)

    # y*log(y) folded to compile-time constants -> no EUP transcendentals.
    # Fused form: term = y*log(y) - y*x, computed with two selects only.
    # (Static Python guards avoid 0 * (-inf) when a weight is exactly zero.)
    tgt_term = (conf_logconf - confidence * x) if confidence != 0.0 else jnp.zeros_like(x)
    oth_term = (smooth_logsmooth - smooth_val * x) if smooth_val != 0.0 else jnp.zeros_like(x)
    terms = jnp.where(zero_mask, 0.0, jnp.where(is_tgt, tgt_term, oth_term))

    if return_true_dist:
        td = jnp.where(zero_mask, 0.0,
                       jnp.where(is_tgt, jnp.float32(confidence),
                                 jnp.float32(smooth_val)))
        tdist_ref[...] = td.astype(tdist_ref.dtype)

    # lane-reduce first (XLU), then a tiny (tile_n, 1) sublane reduce.
    row_sum = jnp.sum(terms, axis=-1, keepdims=True)
    loss_ref[0, 0] = jnp.sum(row_sum)           # per-tile partial


def _pick_tile_n(n, v, x_itemsize, td_itemsize, return_true_dist, vmem_bytes):
    # double-buffered x (+ true_dist) tiles + in-kernel f32/i32 temporaries.
    budget = vmem_bytes // 4
    per_row = v * (2 * x_itemsize
                   + (2 * td_itemsize if return_true_dist else 0)
                   + 12) + 16
    min_tile = 16 if x_itemsize < 4 else 8      # bf16 sublane packing needs 16
    tile = (budget // per_row) // min_tile * min_tile
    tile = max(min_tile, min(tile, 2048))
    tile = min(tile, _round_up(n, min_tile))
    # ensure >= 2 grid steps when possible so the "parallel" axis can use both
    # TensorCores on v7x (free ~2x there; harmless on v5e/v6e).
    if pl.cdiv(n, tile) < 2 and n > min_tile:
        tile = max(min_tile, _round_up(pl.cdiv(n, 2), min_tile))
    return tile


def label_smoothing_loss(x, target, *, size, padding_idx, smoothing,
                         return_true_dist=True, true_dist_dtype=jnp.float32):
    """x: (N, size) log-probs (f32 or bf16); target: (N,) int.

    Returns (loss_scalar_f32, true_dist_or_None).
    """
    n, v = x.shape
    assert v == size
    # Note: size == 2 divides by zero in the original module too; only
    # meaningful when smoothing > 0.
    confidence = 1.0 - smoothing
    smooth_val = (smoothing / (size - 2)) if smoothing != 0.0 else 0.0
    conf_logconf = confidence * math.log(confidence) if confidence > 0.0 else 0.0
    smooth_logsmooth = smooth_val * math.log(smooth_val) if smooth_val > 0.0 else 0.0

    x_itemsize = jnp.dtype(x.dtype).itemsize
    td_itemsize = jnp.dtype(true_dist_dtype).itemsize
    vmem_bytes = _vmem_capacity_bytes()
    tile_n = _pick_tile_n(n, v, x_itemsize, td_itemsize, return_true_dist, vmem_bytes)
    num_tiles = pl.cdiv(n, tile_n)

    tgt2d = target.astype(jnp.int32).reshape(n, 1)

    kernel = functools.partial(
        _label_smoothing_kernel,
        n_rows=n, padding_idx=padding_idx,
        confidence=confidence, smooth_val=smooth_val,
        conf_logconf=conf_logconf, smooth_logsmooth=smooth_logsmooth,
        return_true_dist=return_true_dist)

    out_shape = []
    out_specs = []
    bytes_accessed = n * v * x_itemsize + n * 4 + num_tiles * 4
    if return_true_dist:
        out_shape.append(jax.ShapeDtypeStruct((n, v), true_dist_dtype))
        out_specs.append(pl.BlockSpec((tile_n, v), lambda i: (i, 0)))
        bytes_accessed += n * v * td_itemsize
    out_shape.append(jax.ShapeDtypeStruct((num_tiles, 1), jnp.float32))
    out_specs.append(pl.BlockSpec((1, 1), lambda i: (i, 0),
                                  memory_space=pltpu.SMEM))

    outs = pl.pallas_call(
        kernel,
        out_shape=tuple(out_shape),
        grid=(num_tiles,),
        in_specs=[
            pl.BlockSpec((tile_n, v), lambda i: (i, 0)),   # x, native dtype
            pl.BlockSpec((tile_n, 1), lambda i: (i, 0)),   # target
        ],
        out_specs=tuple(out_specs),
        compiler_params=pltpu.CompilerParams(
            dimension_semantics=("parallel",),
            vmem_limit_bytes=max(32 * 1024 * 1024, (vmem_bytes * 5) // 8)),
        cost_estimate=pl.CostEstimate(
            flops=5 * n * v, transcendentals=0,
            bytes_accessed=int(bytes_accessed)),
    )(x, tgt2d)

    if return_true_dist:
        true_dist, partials = outs
    else:
        (partials,) = outs
        true_dist = None

    loss = jnp.sum(partials)
    return loss, true_dist


def _reference(x, target, *, size, padding_idx, smoothing):
    x = x.astype(jnp.float32)
    confidence = 1.0 - smoothing
    smooth_val = (smoothing / (size - 2)) if smoothing != 0.0 else 0.0
    n, v = x.shape
    col = jnp.arange(v)[None, :]
    tgt = target[:, None]
    td = jnp.where(col == tgt, confidence, smooth_val).astype(jnp.float32)
    td = jnp.where(col == padding_idx, 0.0, td)
    td = jnp.where(tgt == padding_idx, 0.0, td)
    terms = jnp.where(td > 0, td * (jnp.log(jnp.where(td > 0, td, 1.0)) - x), 0.0)
    return jnp.sum(terms), td


def _run_case(key, n, size, padding_idx, smoothing, dtype=jnp.float32,
              return_true_dist=True):
    kx, kt = jax.random.split(key)
    logits = jax.random.normal(kx, (n, size), dtype=jnp.float32)
    x = jax.nn.log_softmax(logits, axis=-1).astype(dtype)
    target = jax.random.randint(kt, (n,), 0, size, dtype=jnp.int32)
    target = target.at[n // 2].set(padding_idx)          # include a padded row

    loss, true_dist = label_smoothing_loss(
        x, target, size=size, padding_idx=padding_idx, smoothing=smoothing,
        return_true_dist=return_true_dist)
    jax.block_until_ready(loss)
    if true_dist is not None:
        jax.block_until_ready(true_dist)

    ref_loss, ref_td = _reference(
        x, target, size=size, padding_idx=padding_idx, smoothing=smoothing)
    assert jnp.allclose(loss, ref_loss, rtol=1e-5, atol=1e-5), (loss, ref_loss)
    if true_dist is not None:
        assert jnp.allclose(true_dist, ref_td, rtol=1e-6, atol=1e-6)


if __name__ == "__main__":
    key = jax.random.PRNGKey(0)
    k1, k2, k3 = jax.random.split(key, 3)

    # lane-aligned vocab, f32, with true_dist output (module parity)
    _run_case(k1, n=8, size=128, padding_idx=0, smoothing=0.1)
    # non-aligned vocab / row count (ragged V and ragged last row tile, no host padding)
    _run_case(k2, n=10, size=100, padding_idx=0, smoothing=0.1)
    # bf16 input, loss-only fast path (no true_dist HBM write)
    _run_case(k3, n=16, size=128, padding_idx=0, smoothing=0.1,
              dtype=jnp.bfloat16, return_true_dist=False)

    print("KERNEL_OK")
</pallas_src>

<mosaic_0001>
module attributes {stable_mosaic.version = 11 : i64} {
  func.func @_label_smoothing_kernel(%arg0: i32, %arg1: memref<8x128xf32, #tpu.memory_space<vmem>>, %arg2: memref<8x1xi32, #tpu.memory_space<vmem>>, %arg3: memref<8x128xf32, #tpu.memory_space<vmem>>, %arg4: memref<1x1xf32, #tpu.memory_space<smem>>) attributes {dimension_semantics = [#tpu.dimension_semantics<parallel>], iteration_bounds = array<i64: 1>, scalar_prefetch = 0 : i64, scratch_operands = 0 : i64, tpu.core_type = #tpu.core_type<tc>, window_params = [{transform_indices = @transform_0, window_bounds = array<i64: 8, 128>}, {transform_indices = @transform_1, window_bounds = array<i64: 8, 1>}, {transform_indices = @transform_2, window_bounds = array<i64: 8, 128>}, {transform_indices = @transform_3, window_bounds = array<i64: 1, 1>}]} {
    %c0 = arith.constant 0 : index
    %c0_0 = arith.constant 0 : index
    %0 = vector.load %arg1[%c0, %c0_0] : memref<8x128xf32, #tpu.memory_space<vmem>>, vector<8x128xf32>
    %c0_1 = arith.constant 0 : index
    %c0_2 = arith.constant 0 : index
    %1 = vector.load %arg2[%c0_1, %c0_2] : memref<8x1xi32, #tpu.memory_space<vmem>>, vector<8x1xi32>
    %2 = tpu.iota {dimensions = array<i32: 1>} : vector<8x128xi32>
    %3 = tpu.iota {dimensions = array<i32: 0>} : vector<8x1xi32>
    %c8_i32 = arith.constant 8 : i32
    %4 = arith.muli %arg0, %c8_i32 : i32
    %5 = vector.broadcast %4 : i32 to vector<8x1xi32>
    %6 = arith.addi %3, %5 : vector<8x1xi32>
    %7 = vector.broadcast %1 : vector<8x1xi32> to vector<8x128xi32>
    %8 = arith.cmpi eq, %2, %7 : vector<8x128xi32>
    %c0_i32 = arith.constant 0 : i32
    %9 = vector.broadcast %c0_i32 : i32 to vector<8x128xi32>
    %10 = arith.cmpi eq, %2, %9 : vector<8x128xi32>
    %c0_i32_3 = arith.constant 0 : i32
    %11 = vector.broadcast %c0_i32_3 : i32 to vector<8x1xi32>
    %12 = arith.cmpi eq, %1, %11 : vector<8x1xi32>
    %13 = vector.broadcast %12 : vector<8x1xi1> to vector<8x128xi1>
    %14 = arith.ori %10, %13 : vector<8x128xi1>
    %c8_i32_4 = arith.constant 8 : i32
    %15 = vector.broadcast %c8_i32_4 : i32 to vector<8x1xi32>
    %16 = arith.cmpi sge, %6, %15 : vector<8x1xi32>
    %17 = vector.broadcast %16 : vector<8x1xi1> to vector<8x128xi1>
    %18 = arith.ori %14, %17 : vector<8x128xi1>
    %cst = arith.constant 0.899999976 : f32
    %19 = vector.broadcast %cst : f32 to vector<8x128xf32>
    %20 = arith.mulf %19, %0 : vector<8x128xf32>
    %cst_5 = arith.constant -0.0948244631 : f32
    %21 = vector.broadcast %cst_5 : f32 to vector<8x128xf32>
    %22 = arith.subf %21, %20 : vector<8x128xf32>
    %cst_6 = arith.constant 7.93650805E-4 : f32
    %23 = vector.broadcast %cst_6 : f32 to vector<8x128xf32>
    %24 = arith.mulf %23, %0 : vector<8x128xf32>
    %cst_7 = arith.constant -0.00566576747 : f32
    %25 = vector.broadcast %cst_7 : f32 to vector<8x128xf32>
    %26 = arith.subf %25, %24 : vector<8x128xf32>
    %27 = arith.select %8, %22, %26 : vector<8x128xi1>, vector<8x128xf32>
    %cst_8 = arith.constant 0.000000e+00 : f32
    %28 = vector.broadcast %cst_8 : f32 to vector<8x128xf32>
    %29 = arith.select %18, %28, %27 : vector<8x128xi1>, vector<8x128xf32>
    %cst_9 = arith.constant 0.899999976 : f32
    %cst_10 = arith.constant 7.93650805E-4 : f32
    %30 = vector.broadcast %cst_9 : f32 to vector<8x128xf32>
    %31 = vector.broadcast %cst_10 : f32 to vector<8x128xf32>
    %32 = arith.select %8, %30, %31 : vector<8x128xi1>, vector<8x128xf32>
    %cst_11 = arith.constant 0.000000e+00 : f32
    %33 = vector.broadcast %cst_11 : f32 to vector<8x128xf32>
    %34 = arith.select %18, %33, %32 : vector<8x128xi1>, vector<8x128xf32>
    %c0_12 = arith.constant 0 : index
    %c0_13 = arith.constant 0 : index
    %35 = vector.load %arg3[%c0_12, %c0_13] : memref<8x128xf32, #tpu.memory_space<vmem>>, vector<8x128xf32>
    tpu.vector_store %arg3[%c0_12, %c0_13], %34 {strides = array<i32>} : memref<8x128xf32, #tpu.memory_space<vmem>>, vector<8x128xf32>,
    %cst_14 = arith.constant dense<0.000000e+00> : vector<8xf32>
    %36 = vector.multi_reduction <add>, %29, %cst_14 [1] : vector<8x128xf32> to vector<8xf32>
    %37 = vector.shape_cast %36 : vector<8xf32> to vector<8x1xf32>
    %38 = vector.shape_cast %37 : vector<8x1xf32> to vector<1x8x1xf32>
    %cst_15 = arith.constant dense<0.000000e+00> : vector<1xf32>
    %39 = vector.multi_reduction <add>, %38, %cst_15 [1, 2] : vector<1x8x1xf32> to vector<1xf32>
    %40 = vector.shape_cast %39 : vector<1xf32> to vector<1x1x1xf32>
    %41 = vector.extract %40[0, 0, 0] : f32 from vector<1x1x1xf32>
    %c0_16 = arith.constant 0 : index
    %c0_17 = arith.constant 0 : index
    %42 = memref.load %arg4[%c0_16, %c0_17] : memref<1x1xf32, #tpu.memory_space<smem>>
    memref.store %41, %arg4[%c0_16, %c0_17] : memref<1x1xf32, #tpu.memory_space<smem>>
    return
  }
  func.func @transform_0(%arg0: i32) -> (i32, i32) {
    %c0_i32 = arith.constant 0 : i32
    %c0_i32_0 = arith.constant 0 : i32
    return %arg0, %c0_i32 : i32, i32
  }
  func.func @transform_1(%arg0: i32) -> (i32, i32) {
    %c0_i32 = arith.constant 0 : i32
    %c0_i32_0 = arith.constant 0 : i32
    return %arg0, %c0_i32 : i32, i32
  }
  func.func @transform_2(%arg0: i32) -> (i32, i32) {
    %c0_i32 = arith.constant 0 : i32
    %c0_i32_0 = arith.constant 0 : i32
    return %arg0, %c0_i32 : i32, i32
  }
  func.func @transform_3(%arg0: i32) -> (i32, i32) {
    %c0_i32 = arith.constant 0 : i32
    %c0_i32_0 = arith.constant 0 : i32
    return %arg0, %c0_i32 : i32, i32
  }
}

</mosaic_0001>

<llo_original>
// kernel: tpu_custom_call.1
$region0: #{tpu_custom_call.1}
  #allocation0 [shape = 'u32[]', space=smem, size = 0x4, offset = 0x4, fixed_abs, tag = 'smem constant byte address 0x4 - core index']
  #allocation1 [shape = 'u32[144,128]{1,0:T(1,128)}', space=vmem, size = 0x12000, scoped, tag = 'internal scratch']
  %s0 = inlined_call_operand.vmem [shape: f32[8,128], index: 0, kind: input, shape index: {}]
  %s1 = inlined_call_operand.vmem [shape: s32[8,1], index: 1, kind: input, shape index: {}]
  %s2 = inlined_call_operand.hbm [shape: f32[8,128], index: 2, kind: output, shape index: {0}]
  %s3 = inlined_call_operand.hbm [shape: f32[1,1], index: 3, kind: output, shape index: {1}]
  %4 = xla_tuple %s2, %s3
  %s5 = sld [smem:[#allocation0]]
  $region26: #{tpu_custom_call.1} parent=0
    _
  %s7 = ssub.s32 1, %s5
  %s8 = scalar_select 0, %s7, %s5
  $region1: #{tpu_custom_call.1} parent=0
    #allocation2 [shape = 'u8[4096]{0}', space=vmem, size = 0x1000, scoped, tag = 'output window, operand 0, single buffered']
    #allocation3 [shape = 's32[1]{0}', space=sflag, size = 0x4, scoped, tag = 'scoped memory for tpu_custom_call.1']
    #allocation4 [shape = 's32[1]{0}', space=sflag, size = 0x4, scoped, tag = 'scoped memory for tpu_custom_call.1']
    #allocation5 [shape = 'u8[512]{0}', space=smem, size = 0x200, scoped, tag = 'output window, operand 1, single buffered']
    %9 = vsyncpa [#allocation3], 0
    %10 = vsyncpa [#allocation4], 0
    // Predicated region
    $region2: #{tpu_custom_call.1} parent=1 // pred_check
      _
    $region3: #{tpu_custom_call.1} parent=1 // pred_check_branch
      %12 = sbr.rel (0) target = $region5
    $region4: #{tpu_custom_call.1} parent=1 // pred_region
      _
    $region5: #{tpu_custom_call.1} parent=1 // pred_fallthru
      _
    // Predicated region
    $region6: #{tpu_custom_call.1} parent=1 // pred_check
      _
    $region7: #{tpu_custom_call.1} parent=1 // pred_check_branch
      %14 = sbr.rel (0) target = $region9
    $region8: #{tpu_custom_call.1} parent=1 // pred_region
      _
    $region9: #{tpu_custom_call.1} parent=1 // pred_fallthru
      _
    %v15 = vld [vmem:[%s0] sm:$0xff]
    %v16 = vld [vmem:[%s1] sm:$0xff]
    %v17 = vlaneseq
    %v18 = vand.u32 %v17, 127
    %v19 = vlaneseq
    %v20 = vshrl.u32 %v19, 7
    %s21 = smul.u32 0, 8
    %v22 = vstv %s21
    %v23 = vadd.s32 %v20, %v22
    %24 = vset.pattern.permute.xlu0 0
    %25 = vperm.xlu0 %24, %v16
    %v26 = vpop.permute.xlu0 %25
    %vm27 = vcmp.eq.s32.totalorder %v18, %v26
    %vm28 = vcmp.eq.s32.totalorder %v18, 0
    %vm29 = vcmp.eq.s32.totalorder %v16, 0
    %v30 = vsel %vm29, 1, 0
    %31 = vset.pattern.permute.xlu0 0
    %32 = vperm.xlu0 %31, %v30
    %v33 = vpop.permute.xlu0 %32
    %vm34 = vcmp.eq.s32.totalorder %v33, 1
    %vm35 = vmor %vm28, %vm34
    %vm36 = vcmp.ge.s32.totalorder %v23, 8
    %v37 = vsel %vm36, 1, 0
    %vm38 = vcmp.eq.s32.totalorder %v37, 1
    %vm39 = vmor %vm35, %vm38
    %v40 = vmul.f32 %v15, 0.9
    %v41 = vsub.f32 -0.09482446, %v40
    %v42 = vmul.f32 %v15, 0.0007936508
    %v43 = vsub.f32 -0.0056657675, %v42
    %v44 = vsel %vm27, %v41, %v43
    %v45 = vsel %vm39, 0.0, %v44
    %v46 = vsel %vm27, 0.9, 0.0007936508
    %v47 = vsel %vm39, 0.0, %v46
    %48 = vst [vmem:[#allocation2] sm:$0xff] %v47
    %49 = vadd.xlane.f32.xlu0 %v45
    %v50 = vpop.xlane.xlu0 %49
    %vm51 = vcmask 7168
    %v52 = vsel %vm51, %v50, 0.0
    %53 = vadd.xlane.f32.xlu0 %v52
    %v54 = vpop.xlane.xlu0 %53
    %v55 = vrot.slane %v54, 4
    %v56 = vadd.f32 %v54, %v55
    %v57 = vrot.slane %v56, 2
    %v58 = vadd.f32 %v56, %v57
    %v59 = vrot.slane %v58, 1
    %v60 = vadd.f32 %v58, %v59
    %s61 = vtos %v60
    %s62 = scalar_lea.smem [#allocation5], 0
    %63 = sst [smem:[%s62]] %s61
    // Predicated region
    $region10: #{tpu_custom_call.1} parent=1 // pred_check
      _
    $region11: #{tpu_custom_call.1} parent=1 // pred_check_branch
      %65 = sbr.rel (0) target = $region13
    $region12: #{tpu_custom_call.1} parent=1 // pred_region
      %s67 = ssub.s32 128, 128
      %68 = vsyncadd [#allocation3], %s67
      %s70 = sshll.u32 [#allocation2], 4
      %s71 = int_to_ptr.vmem [resolvable:$true] %s70
      %73 = dma.vmem_to_hbm [thread:$0]  %s71, 128, %s2, [#allocation3]
    $region13: #{tpu_custom_call.1} parent=1 // pred_fallthru
      _
    // Predicated region
    $region14: #{tpu_custom_call.1} parent=1 // pred_check
      _
    $region15: #{tpu_custom_call.1} parent=1 // pred_check_branch
      %75 = sbr.rel (0) target = $region17
    $region16: #{tpu_custom_call.1} parent=1 // pred_region
      %s77 = ssub.s32 16, 16
      %78 = vsyncadd [#allocation4], %s77
      %81 = dma.smem_to_hbm [#allocation5], 16, %s3, [#allocation4]
    $region17: #{tpu_custom_call.1} parent=1 // pred_fallthru
      _
    // Predicated region
    $region18: #{tpu_custom_call.1} parent=1 // pred_check
      _
    $region19: #{tpu_custom_call.1} parent=1 // pred_check_branch
      %83 = sbr.rel (0) target = $region21
    $region20: #{tpu_custom_call.1} parent=1 // pred_region
      %84 = dma.done [#allocation3], 128
    $region21: #{tpu_custom_call.1} parent=1 // pred_fallthru
      _
    // Predicated region
    $region22: #{tpu_custom_call.1} parent=1 // pred_check
      _
    $region23: #{tpu_custom_call.1} parent=1 // pred_check_branch
      %86 = sbr.rel (0) target = $region25
    $region24: #{tpu_custom_call.1} parent=1 // pred_region
      %87 = dma.done [#allocation4], 16
    $region25: #{tpu_custom_call.1} parent=1 // pred_fallthru
      _
    %88 = sfence
    %89 = vsyncpa [#allocation3], 1
    %90 = vsyncpa [#allocation4], 1

</llo_original>
